<compile_context>
chip_gen: v5e
topology: v5e:2x2
jax: 0.10.0
libtpu: 0.0.40
codegen_flags: <defaults>
</compile_context>

<pallas_src>
import functools

import jax
import jax.numpy as jnp
from jax.experimental import pallas as pl
from jax.experimental.pallas import tpu as pltpu

_DROP_P = 0.3
_DROP_THRESHOLD = int(_DROP_P * (1 << 32))   # drop iff bits < threshold (uint32 compare)
_INV_KEEP = 1.0 / (1.0 - _DROP_P)


def _fused_kernel(train, mxu_dtype, *refs):
    if train:
        h_ref, bits_ref, we_ref, be_ref, wd_ref, bd_ref, dech_ref, ench_ref = refs
    else:
        h_ref, we_ref, be_ref, wd_ref, bd_ref, dech_ref, ench_ref = refs

    h = h_ref[...]                                            # (TB, D) f32

    if train:
        # Dropout(p=0.3): unsigned integer threshold compare -> select.
        # The 1/0.7 inverted-dropout scale is applied after the encoder matmul
        # (linear, so equivalent) on the much narrower (TB, E) tile.
        keep = bits_ref[...] >= jnp.uint32(_DROP_THRESHOLD)
        h = jnp.where(keep, h, jnp.zeros_like(h))

    we = we_ref[...]                                          # (D, E)
    wd = wd_ref[...]                                          # (E, V)
    low_precision = jnp.dtype(mxu_dtype) != jnp.dtype(jnp.float32)
    if low_precision:
        h = h.astype(mxu_dtype)
        we = we.astype(mxu_dtype)
        wd = wd.astype(mxu_dtype)

    # Encoder: (TB, D) @ (D, E) with f32 accumulation; bias add in f32.
    ench = jnp.dot(h, we, preferred_element_type=jnp.float32)
    if train:
        ench = ench * jnp.float32(_INV_KEEP)
    ench = ench + be_ref[...]

    # Decoder: (TB, E) @ (E, V) with f32 accumulation.
    dech_in = ench.astype(mxu_dtype) if low_precision else ench
    dech = jnp.dot(dech_in, wd, preferred_element_type=jnp.float32) + bd_ref[...]

    ench_ref[...] = ench.astype(ench_ref.dtype)
    dech_ref[...] = dech.astype(dech_ref.dtype)


def _round_up(x, m):
    return ((x + m - 1) // m) * m


def table_cell_model_forward(context_vecs, doc_ids, params, *, train=True,
                             rng_key=None, block_b=256, mxu_dtype=jnp.float32):
    """JAX/Pallas equivalent of TableCellModel_DM_InferSent.forward.

    context_vecs: (B, num_context, vdim) float32
    doc_ids: unused (kept for signature parity with the PyTorch module)
    Returns (dech (B, vdim), ench (B, encdim)) — same order as PyTorch.
    """
    del doc_ids  # unused in the reference forward
    B = context_vecs.shape[0]
    h = context_vecs.reshape(B, -1)              # (B, D)
    D = h.shape[1]

    we_t = params["enc_w_t"]                     # (D, E)  pre-transposed at init
    be = params["enc_b"]                         # (1, E)
    wd_t = params["dec_w_t"]                     # (E, V)  pre-transposed at init
    bd = params["dec_b"]                         # (1, V)
    E = we_t.shape[1]
    V = wd_t.shape[1]

    # Batch tile: multiple of 8 (f32 sublane), capped at block_b; pad B if needed.
    TB = max(8, min(_round_up(B, 8), (block_b // 8) * 8))
    Bp = _round_up(B, TB)
    if Bp != B:
        h = jnp.pad(h, ((0, Bp - B), (0, 0)))
    grid = (Bp // TB,)

    kernel = functools.partial(_fused_kernel, train, mxu_dtype)

    in_arrays = [h]
    in_specs = [pl.BlockSpec((TB, D), lambda i: (i, 0))]
    if train:
        if rng_key is None:
            rng_key = jax.random.PRNGKey(0)
        bits = jax.random.bits(rng_key, (Bp, D), dtype=jnp.uint32)
        in_arrays.append(bits)
        in_specs.append(pl.BlockSpec((TB, D), lambda i: (i, 0)))
    in_arrays += [we_t, be, wd_t, bd]
    in_specs += [
        pl.BlockSpec((D, E), lambda i: (0, 0)),   # We^T : VMEM-resident across tiles
        pl.BlockSpec((1, E), lambda i: (0, 0)),   # be
        pl.BlockSpec((E, V), lambda i: (0, 0)),   # Wd^T : VMEM-resident across tiles
        pl.BlockSpec((1, V), lambda i: (0, 0)),   # bd
    ]

    dech, ench = pl.pallas_call(
        kernel,
        out_shape=(
            jax.ShapeDtypeStruct((Bp, V), jnp.float32),   # dech
            jax.ShapeDtypeStruct((Bp, E), jnp.float32),   # ench
        ),
        grid_spec=pl.GridSpec(
            grid=grid,
            in_specs=in_specs,
            out_specs=(
                pl.BlockSpec((TB, V), lambda i: (i, 0)),
                pl.BlockSpec((TB, E), lambda i: (i, 0)),
            ),
        ),
        compiler_params=pltpu.CompilerParams(
            dimension_semantics=("parallel",),            # megacore-split batch tiles
        ),
    )(*in_arrays)

    if Bp != B:
        dech = dech[:B]
        ench = ench[:B]
    return dech, ench


def init_params(key, vdim, encdim, num_context):
    """Parameters stored pre-transposed / pre-reshaped for row-major MXU matmuls.

    enc_w_t == nn.Linear(D, encdim).weight.T   (D, E)
    dec_w_t == nn.Linear(encdim, vdim).weight.T (E, V)
    Biases stored as (1, E) / (1, V) rows.
    """
    D = vdim * num_context
    k1, k2, k3, k4 = jax.random.split(key, 4)
    enc_bound = float(D) ** -0.5
    dec_bound = float(encdim) ** -0.5
    return {
        "enc_w_t": jax.random.uniform(k1, (D, encdim), jnp.float32, -enc_bound, enc_bound),
        "enc_b":   jax.random.uniform(k2, (1, encdim), jnp.float32, -enc_bound, enc_bound),
        "dec_w_t": jax.random.uniform(k3, (encdim, vdim), jnp.float32, -dec_bound, dec_bound),
        "dec_b":   jax.random.uniform(k4, (1, vdim), jnp.float32, -dec_bound, dec_bound),
    }


if __name__ == "__main__":
    # Small shapes consistent with the module: batch=8, num_context=4, vdim=32 -> D=128, E=64
    B, NUM_CONTEXT, VDIM, ENCDIM = 8, 4, 32, 64

    key = jax.random.PRNGKey(0)
    kp, kx, kd = jax.random.split(key, 3)
    params = init_params(kp, VDIM, ENCDIM, NUM_CONTEXT)
    context_vecs = jax.random.normal(kx, (B, NUM_CONTEXT, VDIM), jnp.float32)
    doc_ids = jnp.arange(B, dtype=jnp.int32)

    # ---- Eval path (train=False): deterministic, check against pure-JAX reference ----
    dech, ench = table_cell_model_forward(context_vecs, doc_ids, params, train=False)
    jax.block_until_ready((dech, ench))

    h_ref = context_vecs.reshape(B, -1)
    ench_ref = h_ref @ params["enc_w_t"] + params["enc_b"]
    dech_ref = ench_ref @ params["dec_w_t"] + params["dec_b"]
    assert jnp.allclose(ench, ench_ref, atol=1e-4, rtol=1e-4)
    assert jnp.allclose(dech, dech_ref, atol=1e-4, rtol=1e-4)

    # ---- Train path (dropout p=0.3, inverted scaling): check against reference
    #      built from the same random bits ----
    dech_t, ench_t = table_cell_model_forward(context_vecs, doc_ids, params,
                                              train=True, rng_key=kd)
    jax.block_until_ready((dech_t, ench_t))
    assert dech_t.shape == (B, VDIM) and ench_t.shape == (B, ENCDIM)

    bits_ref = jax.random.bits(kd, (B, NUM_CONTEXT * VDIM), dtype=jnp.uint32)
    keep_ref = bits_ref >= jnp.uint32(_DROP_THRESHOLD)
    h_drop = jnp.where(keep_ref, h_ref, 0.0) * jnp.float32(_INV_KEEP)
    ench_t_ref = h_drop @ params["enc_w_t"] + params["enc_b"]
    dech_t_ref = ench_t_ref @ params["dec_w_t"] + params["dec_b"]
    assert jnp.allclose(ench_t, ench_t_ref, atol=1e-4, rtol=1e-4)
    assert jnp.allclose(dech_t, dech_t_ref, atol=1e-4, rtol=1e-4)

    print("KERNEL_OK")
</pallas_src>

<mosaic_0001>
module attributes {stable_mosaic.version = 11 : i64} {
  func.func @_fused_kernel(%arg0: i32, %arg1: memref<8x128xf32, #tpu.memory_space<vmem>>, %arg2: memref<128x64xf32, #tpu.memory_space<vmem>>, %arg3: memref<1x64xf32, #tpu.memory_space<vmem>>, %arg4: memref<64x32xf32, #tpu.memory_space<vmem>>, %arg5: memref<1x32xf32, #tpu.memory_space<vmem>>, %arg6: memref<8x32xf32, #tpu.memory_space<vmem>>, %arg7: memref<8x64xf32, #tpu.memory_space<vmem>>) attributes {dimension_semantics = [#tpu.dimension_semantics<parallel>], iteration_bounds = array<i64: 1>, scalar_prefetch = 0 : i64, scratch_operands = 0 : i64, tpu.core_type = #tpu.core_type<tc>, window_params = [{transform_indices = @transform_0, window_bounds = array<i64: 8, 128>}, {pipeline_mode = #tpu.pipeline_mode<synchronous>, transform_indices = @transform_1, window_bounds = array<i64: 128, 64>}, {pipeline_mode = #tpu.pipeline_mode<synchronous>, transform_indices = @transform_2, window_bounds = array<i64: 1, 64>}, {pipeline_mode = #tpu.pipeline_mode<synchronous>, transform_indices = @transform_3, window_bounds = array<i64: 64, 32>}, {pipeline_mode = #tpu.pipeline_mode<synchronous>, transform_indices = @transform_4, window_bounds = array<i64: 1, 32>}, {transform_indices = @transform_5, window_bounds = array<i64: 8, 32>}, {transform_indices = @transform_6, window_bounds = array<i64: 8, 64>}]} {
    %c0 = arith.constant 0 : index
    %c0_0 = arith.constant 0 : index
    %0 = vector.load %arg1[%c0, %c0_0] : memref<8x128xf32, #tpu.memory_space<vmem>>, vector<8x128xf32>
    %c0_1 = arith.constant 0 : index
    %c0_2 = arith.constant 0 : index
    %1 = vector.load %arg2[%c0_1, %c0_2] : memref<128x64xf32, #tpu.memory_space<vmem>>, vector<128x64xf32>
    %c0_3 = arith.constant 0 : index
    %c0_4 = arith.constant 0 : index
    %2 = vector.load %arg4[%c0_3, %c0_4] : memref<64x32xf32, #tpu.memory_space<vmem>>, vector<64x32xf32>
    %cst = arith.constant dense<0.000000e+00> : vector<8x64xf32>
    %3 = tpu.matmul %0, %1, %cst {dimension_numbers = #tpu.dot_dimension_numbers<[1], [0], [0], [1], [0, 0, 1, 1], [], []>} : vector<8x128xf32>, vector<128x64xf32>, vector<8x64xf32> -> vector<8x64xf32>
    %c0_5 = arith.constant 0 : index
    %c0_6 = arith.constant 0 : index
    %4 = vector.load %arg3[%c0_5, %c0_6] : memref<1x64xf32, #tpu.memory_space<vmem>>, vector<1x64xf32>
    %5 = vector.broadcast %4 : vector<1x64xf32> to vector<8x64xf32>
    %6 = arith.addf %3, %5 : vector<8x64xf32>
    %cst_7 = arith.constant dense<0.000000e+00> : vector<8x32xf32>
    %7 = tpu.matmul %6, %2, %cst_7 {dimension_numbers = #tpu.dot_dimension_numbers<[1], [0], [0], [1], [0, 0, 1, 1], [], []>} : vector<8x64xf32>, vector<64x32xf32>, vector<8x32xf32> -> vector<8x32xf32>
    %c0_8 = arith.constant 0 : index
    %c0_9 = arith.constant 0 : index
    %8 = vector.load %arg5[%c0_8, %c0_9] : memref<1x32xf32, #tpu.memory_space<vmem>>, vector<1x32xf32>
    %9 = vector.broadcast %8 : vector<1x32xf32> to vector<8x32xf32>
    %10 = arith.addf %7, %9 : vector<8x32xf32>
    %c0_10 = arith.constant 0 : index
    %c0_11 = arith.constant 0 : index
    %11 = vector.load %arg7[%c0_10, %c0_11] : memref<8x64xf32, #tpu.memory_space<vmem>>, vector<8x64xf32>
    tpu.vector_store %arg7[%c0_10, %c0_11], %6 {strides = array<i32>} : memref<8x64xf32, #tpu.memory_space<vmem>>, vector<8x64xf32>,
    %c0_12 = arith.constant 0 : index
    %c0_13 = arith.constant 0 : index
    %12 = vector.load %arg6[%c0_12, %c0_13] : memref<8x32xf32, #tpu.memory_space<vmem>>, vector<8x32xf32>
    tpu.vector_store %arg6[%c0_12, %c0_13], %10 {strides = array<i32>} : memref<8x32xf32, #tpu.memory_space<vmem>>, vector<8x32xf32>,
    return
  }
  func.func @transform_0(%arg0: i32) -> (i32, i32) {
    %c0_i32 = arith.constant 0 : i32
    %c0_i32_0 = arith.constant 0 : i32
    return %arg0, %c0_i32 : i32, i32
  }
  func.func @transform_1(%arg0: i32) -> (i32, i32) {
    %c0_i32 = arith.constant 0 : i32
    %c0_i32_0 = arith.constant 0 : i32
    %c0_i32_1 = arith.constant 0 : i32
    return %c0_i32, %c0_i32_0 : i32, i32
  }
  func.func @transform_2(%arg0: i32) -> (i32, i32) {
    %c0_i32 = arith.constant 0 : i32
    %c0_i32_0 = arith.constant 0 : i32
    %c0_i32_1 = arith.constant 0 : i32
    return %c0_i32, %c0_i32_0 : i32, i32
  }
  func.func @transform_3(%arg0: i32) -> (i32, i32) {
    %c0_i32 = arith.constant 0 : i32
    %c0_i32_0 = arith.constant 0 : i32
    %c0_i32_1 = arith.constant 0 : i32
    return %c0_i32, %c0_i32_0 : i32, i32
  }
  func.func @transform_4(%arg0: i32) -> (i32, i32) {
    %c0_i32 = arith.constant 0 : i32
    %c0_i32_0 = arith.constant 0 : i32
    %c0_i32_1 = arith.constant 0 : i32
    return %c0_i32, %c0_i32_0 : i32, i32
  }
  func.func @transform_5(%arg0: i32) -> (i32, i32) {
    %c0_i32 = arith.constant 0 : i32
    %c0_i32_0 = arith.constant 0 : i32
    return %arg0, %c0_i32 : i32, i32
  }
  func.func @transform_6(%arg0: i32) -> (i32, i32) {
    %c0_i32 = arith.constant 0 : i32
    %c0_i32_0 = arith.constant 0 : i32
    return %arg0, %c0_i32 : i32, i32
  }
}

</mosaic_0001>

<llo_original>
// kernel: tpu_custom_call.1
$region0: #{tpu_custom_call.1}
  #allocation0 [shape = 'u32[]', space=smem, size = 0x4, offset = 0x4, fixed_abs, tag = 'smem constant byte address 0x4 - core index']
  #allocation1 [shape = 'u32[72,128]{1,0:T(1,128)}', space=vmem, size = 0x9000, scoped, tag = 'internal scratch']
  %s0 = inlined_call_operand.vmem [shape: f32[8,128], index: 0, kind: input, shape index: {}]
  %s1 = inlined_call_operand.vmem [shape: f32[128,64], index: 1, kind: input, shape index: {}]
  %s2 = inlined_call_operand.vmem [shape: f32[1,64], index: 2, kind: input, shape index: {}]
  %s3 = inlined_call_operand.vmem [shape: f32[64,32], index: 3, kind: input, shape index: {}]
  %s4 = inlined_call_operand.vmem [shape: f32[1,32], index: 4, kind: input, shape index: {}]
  %s5 = inlined_call_operand.hbm [shape: f32[8,32], index: 5, kind: output, shape index: {0}]
  %s6 = inlined_call_operand.hbm [shape: f32[8,64], index: 6, kind: output, shape index: {1}]
  %7 = xla_tuple %s5, %s6
  %s8 = sld [smem:[#allocation0]]
  $region38: #{tpu_custom_call.1} parent=0
    _
  %s10 = ssub.s32 1, %s8
  %s11 = scalar_select 0, %s10, %s8
  $region1: #{tpu_custom_call.1} parent=0
    #allocation2 [shape = 'u8[4096]{0}', space=vmem, size = 0x1000, scoped, tag = 'output window, operand 0, single buffered']
    #allocation3 [shape = 's32[1]{0}', space=sflag, size = 0x4, scoped, tag = 'scoped memory for tpu_custom_call.1']
    #allocation4 [shape = 'u8[4096]{0}', space=vmem, size = 0x1000, scoped, tag = 'output window, operand 1, single buffered']
    #allocation5 [shape = 's32[1]{0}', space=sflag, size = 0x4, scoped, tag = 'scoped memory for tpu_custom_call.1']
    %12 = vsyncpa [#allocation3], 0
    %13 = vsyncpa [#allocation5], 0
    // Predicated region
    $region2: #{tpu_custom_call.1} parent=1 // pred_check
      _
    $region3: #{tpu_custom_call.1} parent=1 // pred_check_branch
      %15 = sbr.rel (0) target = $region5
    $region4: #{tpu_custom_call.1} parent=1 // pred_region
      _
    $region5: #{tpu_custom_call.1} parent=1 // pred_fallthru
      _
    // Predicated region
    $region6: #{tpu_custom_call.1} parent=1 // pred_check
      _
    $region7: #{tpu_custom_call.1} parent=1 // pred_check_branch
      %17 = sbr.rel (0) target = $region9
    $region8: #{tpu_custom_call.1} parent=1 // pred_region
      _
    $region9: #{tpu_custom_call.1} parent=1 // pred_fallthru
      _
    // Predicated region
    $region10: #{tpu_custom_call.1} parent=1 // pred_check
      _
    $region11: #{tpu_custom_call.1} parent=1 // pred_check_branch
      %19 = sbr.rel (0) target = $region13
    $region12: #{tpu_custom_call.1} parent=1 // pred_region
      _
    $region13: #{tpu_custom_call.1} parent=1 // pred_fallthru
      _
    // Predicated region
    $region14: #{tpu_custom_call.1} parent=1 // pred_check
      _
    $region15: #{tpu_custom_call.1} parent=1 // pred_check_branch
      %21 = sbr.rel (0) target = $region17
    $region16: #{tpu_custom_call.1} parent=1 // pred_region
      _
    $region17: #{tpu_custom_call.1} parent=1 // pred_fallthru
      _
    // Predicated region
    $region18: #{tpu_custom_call.1} parent=1 // pred_check
      _
    $region19: #{tpu_custom_call.1} parent=1 // pred_check_branch
      %23 = sbr.rel (0) target = $region21
    $region20: #{tpu_custom_call.1} parent=1 // pred_region
      _
    $region21: #{tpu_custom_call.1} parent=1 // pred_fallthru
      _
    %v24 = vld [vmem:[%s0] sm:$0xff]
    %v25 = vld [vmem:[%s1] sm:$0xff]
    %v26 = vld [vmem:[%s1 + $0x8] sm:$0xff]
    %v27 = vld [vmem:[%s1 + $0x10] sm:$0xff]
    %v28 = vld [vmem:[%s1 + $0x18] sm:$0xff]
    %v29 = vld [vmem:[%s1 + $0x20] sm:$0xff]
    %v30 = vld [vmem:[%s1 + $0x28] sm:$0xff]
    %v31 = vld [vmem:[%s1 + $0x30] sm:$0xff]
    %v32 = vld [vmem:[%s1 + $0x38] sm:$0xff]
    %v33 = vld [vmem:[%s1 + $0x40] sm:$0xff]
    %v34 = vld [vmem:[%s1 + $0x48] sm:$0xff]
    %v35 = vld [vmem:[%s1 + $0x50] sm:$0xff]
    %v36 = vld [vmem:[%s1 + $0x58] sm:$0xff]
    %v37 = vld [vmem:[%s1 + $0x60] sm:$0xff]
    %v38 = vld [vmem:[%s1 + $0x68] sm:$0xff]
    %v39 = vld [vmem:[%s1 + $0x70] sm:$0xff]
    %v40 = vld [vmem:[%s1 + $0x78] sm:$0xff]
    %v41 = vld [vmem:[%s3] sm:$0xff]
    %v42 = vld [vmem:[%s3 + $0x8] sm:$0xff]
    %v43 = vld [vmem:[%s3 + $0x10] sm:$0xff]
    %v44 = vld [vmem:[%s3 + $0x18] sm:$0xff]
    %v45 = vld [vmem:[%s3 + $0x20] sm:$0xff]
    %v46 = vld [vmem:[%s3 + $0x28] sm:$0xff]
    %v47 = vld [vmem:[%s3 + $0x30] sm:$0xff]
    %v48 = vld [vmem:[%s3 + $0x38] sm:$0xff]
    %v49 = vld [vmem:[%s2] sm:$0x1]
    %v51 = vperm.slane %v49, 0
    %53 = vmatpush.msra.mxu0 %v40
    %54 = vmatpush.msra.mxu0 %v39
    %55 = vmatpush.msra.mxu0 %v38
    %56 = vmatpush.msra.mxu0 %v37
    %57 = vmatpush.msra.mxu0 %v36
    %58 = vmatpush.msra.mxu0 %v35
    %59 = vmatpush.msra.mxu0 %v34
    %60 = vmatpush.msra.mxu0 %v33
    %61 = vmatpush.msra.mxu0 %v32
    %62 = vmatpush.msra.mxu0 %v31
    %63 = vmatpush.msra.mxu0 %v30
    %64 = vmatpush.msra.mxu0 %v29
    %65 = vmatpush.msra.mxu0 %v28
    %66 = vmatpush.msra.mxu0 %v27
    %67 = vmatpush.msra.mxu0 %v26
    %68 = vmatpush.msra.mxu0 %v25
    %69 = vmatmul.f32.gmra.mxu0 %v24
    %v70 = vpop.f32.mrf.mxu0
    %v71 = vadd.f32 %v51, %v70
    %72 = vdwg.mxu0
    %v73 = vld [vmem:[%s4] sm:$0x1]
    %v75 = vperm.slane %v73, 0
    %vm77 = vcmask 523264
    %v79 = vsel %vm77, %v71, 0
    %81 = vmatpush.msra.mxu0 0.0
    %82 = vmatpush.msra.mxu0 0.0
    %83 = vmatpush.msra.mxu0 0.0
    %84 = vmatpush.msra.mxu0 0.0
    %85 = vmatpush.msra.mxu0 0.0
    %86 = vmatpush.msra.mxu0 0.0
    %87 = vmatpush.msra.mxu0 0.0
    %88 = vmatpush.msra.mxu0 0.0
    %89 = vmatpush.msra.mxu0 %v48
    %90 = vmatpush.msra.mxu0 %v47
    %91 = vmatpush.msra.mxu0 %v46
    %92 = vmatpush.msra.mxu0 %v45
    %93 = vmatpush.msra.mxu0 %v44
    %94 = vmatpush.msra.mxu0 %v43
    %95 = vmatpush.msra.mxu0 %v42
    %96 = vmatpush.msra.mxu0 %v41
    %97 = vmatmul.f32.gmra.mxu0 %v79
    %v98 = vpop.f32.mrf.mxu0
    %v99 = vadd.f32 %v75, %v98
    %100 = vdwg.mxu0
    %101 = vst.msk [vmem:[#allocation4] sm:$0xff] %vm77, %v71
    %vm102 = vcmask 261120
    %103 = vst.msk [vmem:[#allocation2] sm:$0xff] %vm102, %v99
    // Predicated region
    $region22: #{tpu_custom_call.1} parent=1 // pred_check
      _
    $region23: #{tpu_custom_call.1} parent=1 // pred_check_branch
      %105 = sbr.rel (0) target = $region25
    $region24: #{tpu_custom_call.1} parent=1 // pred_region
      %107 = vsyncadd [#allocation3], 0
      %s109 = sshll.u32 [#allocation2], 4
      %s110 = int_to_ptr.vmem [resolvable:$true] %s109
      %s111 = sshll.u32 %s5, 4
      %s112 = int_to_ptr.hbm [resolvable:$true] %s111
      %114 = dma.vmem_to_hbm [thread:$0]  %s110, 128, %s112, [#allocation3]
    $region25: #{tpu_custom_call.1} parent=1 // pred_fallthru
      _
    // Predicated region
    $region26: #{tpu_custom_call.1} parent=1 // pred_check
      _
    $region27: #{tpu_custom_call.1} parent=1 // pred_check_branch
      %116 = sbr.rel (0) target = $region29
    $region28: #{tpu_custom_call.1} parent=1 // pred_region
      %118 = vsyncadd [#allocation5], 0
      %s120 = sshll.u32 [#allocation4], 4
      %s121 = int_to_ptr.vmem [resolvable:$true] %s120
      %s122 = sshll.u32 %s6, 4
      %s123 = int_to_ptr.hbm [resolvable:$true] %s122
      %125 = dma.vmem_to_hbm [thread:$0]  %s121, 128, %s123, [#allocation5]
    $region29: #{tpu_custom_call.1} parent=1 // pred_fallthru
      _
    // Predicated region
    $region30: #{tpu_custom_call.1} parent=1 // pred_check
      _
    $region31: #{tpu_custom_call.1} parent=1 // pred_check_branch
      %127 = sbr.rel (0) target = $region33
    $region32: #{tpu_custom_call.1} parent=1 // pred_region
      %129 = dma.done [#allocation3], 128
    $region33: #{tpu_custom_call.1} parent=1 // pred_fallthru
      _
    // Predicated region
    $region34: #{tpu_custom_call.1} parent=1 // pred_check
      _
    $region35: #{tpu_custom_call.1} parent=1 // pred_check_branch
      %131 = sbr.rel (0) target = $region37
    $region36: #{tpu_custom_call.1} parent=1 // pred_region
      %133 = dma.done [#allocation5], 128
    $region37: #{tpu_custom_call.1} parent=1 // pred_fallthru
      _
    %134 = vsyncpa [#allocation3], 1
    %135 = vsyncpa [#allocation5], 1

</llo_original>
